<compile_context>
chip_gen: v5e
topology: v5e:2x2
jax: 0.10.0
libtpu: 0.0.40
codegen_flags: <defaults>
</compile_context>

<pallas_src>
import jax
import jax.numpy as jnp
from jax.experimental import pallas as pl
from jax.experimental.pallas import tpu as pltpu


def mlp_kernel(x_ref, w1_ref, b1_ref, w2_ref, b2_ref,
               w3_ref, b3_ref, w4t_ref, b4_ref, o_ref):
    # x_ref: (2, T) -- batch on lanes.
    xT = x_ref[...]
    w1 = w1_ref[...]                                   # (32, 2)

    # Layer 1: in_features = 2 -> two VPU broadcast multiply-adds, no MXU.
    h = w1[:, 0:1] * xT[0:1, :] + w1[:, 1:2] * xT[1:2, :] + b1_ref[...]
    h = jnp.maximum(h, 0.0)                            # (32, T)

    # Layers 2 & 3 on the MXU: h^T = W @ h^T  (weights are (out, in)).
    h = jnp.dot(w2_ref[...], h, preferred_element_type=jnp.float32) + b2_ref[...]
    h = jnp.maximum(h, 0.0)                            # (64, T)

    # Dropout(0.2) in the PyTorch forward is never applied -> no-op.

    h = jnp.dot(w3_ref[...], h, preferred_element_type=jnp.float32) + b3_ref[...]
    h = jnp.maximum(h, 0.0)                            # (16, T)

    # Layer 4: out_features = 1 -> elementwise mul + sublane reduce (VPU/XLU).
    # w4t_ref is the (16, 1) column form of the (1, 16) PyTorch weight.
    h = jnp.sum(w4t_ref[...] * h, axis=0, keepdims=True) + b4_ref[...]
    h = jnp.maximum(h, 0.0)                            # (1, T)

    o_ref[...] = h.astype(o_ref.dtype)


def mul_class_forward(x, params, *, batch_tile=256):
    """x: (B, 2) float32. params: PyTorch-native weights w{i}: (out, in), biases b{i}: (out,)."""
    B, D_in = x.shape
    assert D_in == 2
    assert batch_tile % 128 == 0, "batch_tile must be lane-dense (multiple of 128)"

    n_blocks = pl.cdiv(B, batch_tile)
    B_pad = n_blocks * batch_tile

    # Layout plumbing (wrapper side): batch onto lanes, zero-pad to a tile multiple.
    xT = x.T                                            # (2, B)
    if B_pad != B:
        xT = jnp.pad(xT, ((0, 0), (0, B_pad - B)))      # (2, B_pad)

    w1 = params["w1"]                                   # (32, 2)
    w2 = params["w2"]                                   # (64, 32)
    w3 = params["w3"]                                   # (16, 64)
    w4t = params["w4"].reshape(16, 1)                   # (1, 16) -> (16, 1)
    b1 = params["b1"].reshape(-1, 1)                    # (32, 1)
    b2 = params["b2"].reshape(-1, 1)                    # (64, 1)
    b3 = params["b3"].reshape(-1, 1)                    # (16, 1)
    b4 = params["b4"].reshape(-1, 1)                    # (1, 1)

    # Weight/bias blocks use a constant index_map, so Pallas keeps them resident
    # across grid steps; total weight bytes ~13 KB, so default buffering is fine.
    def full_spec(arr):
        return pl.BlockSpec(arr.shape, lambda i: (0, 0))

    out = pl.pallas_call(
        mlp_kernel,
        out_shape=jax.ShapeDtypeStruct((1, B_pad), jnp.float32),
        grid_spec=pltpu.PrefetchScalarGridSpec(
            num_scalar_prefetch=0,
            grid=(n_blocks,),
            in_specs=[
                pl.BlockSpec((D_in, batch_tile), lambda i: (0, i)),  # x^T
                full_spec(w1), full_spec(b1),
                full_spec(w2), full_spec(b2),
                full_spec(w3), full_spec(b3),
                full_spec(w4t), full_spec(b4),
            ],
            out_specs=pl.BlockSpec((1, batch_tile), lambda i: (0, i)),
        ),
        compiler_params=pltpu.CompilerParams(
            dimension_semantics=("parallel",)),
    )(xT, w1, b1, w2, b2, w3, b3, w4t, b4)

    # Back to PyTorch layout (B, 1), dropping the pad rows.
    return out[0, :B].reshape(B, 1)


def init_params(key):
    """Deterministic init mimicking nn.Linear's U(-1/sqrt(in), 1/sqrt(in)), PyTorch-native shapes."""
    sizes = [(32, 2), (64, 32), (16, 64), (1, 16)]      # (out_features, in_features)
    params = {}
    for idx, (fan_out, fan_in) in enumerate(sizes, start=1):
        key, kw, kb = jax.random.split(key, 3)
        bound = 1.0 / jnp.sqrt(jnp.float32(fan_in))
        params[f"w{idx}"] = jax.random.uniform(
            kw, (fan_out, fan_in), jnp.float32, -bound, bound)
        params[f"b{idx}"] = jax.random.uniform(
            kb, (fan_out,), jnp.float32, -bound, bound)
    return params


def reference_forward(x, params):
    h = x
    for i in range(1, 5):
        h = jnp.maximum(h @ params[f"w{i}"].T + params[f"b{i}"], 0.0)
    return h


if __name__ == "__main__":
    key = jax.random.PRNGKey(0)
    key, kx = jax.random.split(key)

    # B deliberately not a multiple of the tile: exercises the padding path and
    # gives a 2-step grid (pads to 512 with batch_tile=256).
    B = 300
    x = jax.random.normal(kx, (B, 2), jnp.float32)

    params = init_params(key)

    out = mul_class_forward(x, params)
    out = jax.block_until_ready(out)

    ref = reference_forward(x, params)
    assert out.shape == (B, 1)
    assert jnp.allclose(out, ref, atol=1e-4, rtol=1e-5), "mismatch vs pure-JAX reference"

    print("KERNEL_OK")
</pallas_src>

<mosaic_0001>
module attributes {stable_mosaic.version = 11 : i64} {
  func.func @mlp_kernel(%arg0: i32, %arg1: memref<2x256xf32, #tpu.memory_space<vmem>>, %arg2: memref<32x2xf32, #tpu.memory_space<vmem>>, %arg3: memref<32x1xf32, #tpu.memory_space<vmem>>, %arg4: memref<64x32xf32, #tpu.memory_space<vmem>>, %arg5: memref<64x1xf32, #tpu.memory_space<vmem>>, %arg6: memref<16x64xf32, #tpu.memory_space<vmem>>, %arg7: memref<16x1xf32, #tpu.memory_space<vmem>>, %arg8: memref<16x1xf32, #tpu.memory_space<vmem>>, %arg9: memref<1x1xf32, #tpu.memory_space<vmem>>, %arg10: memref<1x256xf32, #tpu.memory_space<vmem>>) attributes {dimension_semantics = [#tpu.dimension_semantics<parallel>], iteration_bounds = array<i64: 2>, scalar_prefetch = 0 : i64, scratch_operands = 0 : i64, tpu.core_type = #tpu.core_type<tc>, window_params = [{transform_indices = @transform_0, window_bounds = array<i64: 2, 256>}, {pipeline_mode = #tpu.pipeline_mode<synchronous>, transform_indices = @transform_1, window_bounds = array<i64: 32, 2>}, {pipeline_mode = #tpu.pipeline_mode<synchronous>, transform_indices = @transform_2, window_bounds = array<i64: 32, 1>}, {pipeline_mode = #tpu.pipeline_mode<synchronous>, transform_indices = @transform_3, window_bounds = array<i64: 64, 32>}, {pipeline_mode = #tpu.pipeline_mode<synchronous>, transform_indices = @transform_4, window_bounds = array<i64: 64, 1>}, {pipeline_mode = #tpu.pipeline_mode<synchronous>, transform_indices = @transform_5, window_bounds = array<i64: 16, 64>}, {pipeline_mode = #tpu.pipeline_mode<synchronous>, transform_indices = @transform_6, window_bounds = array<i64: 16, 1>}, {pipeline_mode = #tpu.pipeline_mode<synchronous>, transform_indices = @transform_7, window_bounds = array<i64: 16, 1>}, {pipeline_mode = #tpu.pipeline_mode<synchronous>, transform_indices = @transform_8, window_bounds = array<i64: 1, 1>}, {transform_indices = @transform_9, window_bounds = array<i64: 1, 256>}]} {
    %c0 = arith.constant 0 : index
    %c0_0 = arith.constant 0 : index
    %0 = vector.load %arg1[%c0, %c0_0] : memref<2x256xf32, #tpu.memory_space<vmem>>, vector<2x256xf32>
    %c0_1 = arith.constant 0 : index
    %c0_2 = arith.constant 0 : index
    %1 = vector.load %arg2[%c0_1, %c0_2] : memref<32x2xf32, #tpu.memory_space<vmem>>, vector<32x2xf32>
    %2 = vector.extract_strided_slice %1 {offsets = [0, 0], sizes = [32, 1], strides = [1, 1]} : vector<32x2xf32> to vector<32x1xf32>
    %3 = vector.extract_strided_slice %0 {offsets = [0, 0], sizes = [1, 256], strides = [1, 1]} : vector<2x256xf32> to vector<1x256xf32>
    %4 = vector.broadcast %2 : vector<32x1xf32> to vector<32x256xf32>
    %5 = vector.broadcast %3 : vector<1x256xf32> to vector<32x256xf32>
    %6 = arith.mulf %4, %5 : vector<32x256xf32>
    %7 = vector.extract_strided_slice %1 {offsets = [0, 1], sizes = [32, 1], strides = [1, 1]} : vector<32x2xf32> to vector<32x1xf32>
    %8 = vector.extract_strided_slice %0 {offsets = [1, 0], sizes = [1, 256], strides = [1, 1]} : vector<2x256xf32> to vector<1x256xf32>
    %9 = vector.broadcast %7 : vector<32x1xf32> to vector<32x256xf32>
    %10 = vector.broadcast %8 : vector<1x256xf32> to vector<32x256xf32>
    %11 = arith.mulf %9, %10 : vector<32x256xf32>
    %12 = arith.addf %6, %11 : vector<32x256xf32>
    %c0_3 = arith.constant 0 : index
    %c0_4 = arith.constant 0 : index
    %13 = vector.load %arg3[%c0_3, %c0_4] : memref<32x1xf32, #tpu.memory_space<vmem>>, vector<32x1xf32>
    %14 = vector.broadcast %13 : vector<32x1xf32> to vector<32x256xf32>
    %15 = arith.addf %12, %14 : vector<32x256xf32>
    %cst = arith.constant 0.000000e+00 : f32
    %16 = vector.broadcast %cst : f32 to vector<32x256xf32>
    %17 = arith.maximumf %15, %16 : vector<32x256xf32>
    %c0_5 = arith.constant 0 : index
    %c0_6 = arith.constant 0 : index
    %18 = vector.load %arg4[%c0_5, %c0_6] : memref<64x32xf32, #tpu.memory_space<vmem>>, vector<64x32xf32>
    %cst_7 = arith.constant dense<0.000000e+00> : vector<64x256xf32>
    %19 = tpu.matmul %18, %17, %cst_7 {dimension_numbers = #tpu.dot_dimension_numbers<[1], [0], [0], [1], [0, 0, 1, 1], [], []>} : vector<64x32xf32>, vector<32x256xf32>, vector<64x256xf32> -> vector<64x256xf32>
    %c0_8 = arith.constant 0 : index
    %c0_9 = arith.constant 0 : index
    %20 = vector.load %arg5[%c0_8, %c0_9] : memref<64x1xf32, #tpu.memory_space<vmem>>, vector<64x1xf32>
    %21 = vector.broadcast %20 : vector<64x1xf32> to vector<64x256xf32>
    %22 = arith.addf %19, %21 : vector<64x256xf32>
    %cst_10 = arith.constant 0.000000e+00 : f32
    %23 = vector.broadcast %cst_10 : f32 to vector<64x256xf32>
    %24 = arith.maximumf %22, %23 : vector<64x256xf32>
    %c0_11 = arith.constant 0 : index
    %c0_12 = arith.constant 0 : index
    %25 = vector.load %arg6[%c0_11, %c0_12] : memref<16x64xf32, #tpu.memory_space<vmem>>, vector<16x64xf32>
    %cst_13 = arith.constant dense<0.000000e+00> : vector<16x256xf32>
    %26 = tpu.matmul %25, %24, %cst_13 {dimension_numbers = #tpu.dot_dimension_numbers<[1], [0], [0], [1], [0, 0, 1, 1], [], []>} : vector<16x64xf32>, vector<64x256xf32>, vector<16x256xf32> -> vector<16x256xf32>
    %c0_14 = arith.constant 0 : index
    %c0_15 = arith.constant 0 : index
    %27 = vector.load %arg7[%c0_14, %c0_15] : memref<16x1xf32, #tpu.memory_space<vmem>>, vector<16x1xf32>
    %28 = vector.broadcast %27 : vector<16x1xf32> to vector<16x256xf32>
    %29 = arith.addf %26, %28 : vector<16x256xf32>
    %cst_16 = arith.constant 0.000000e+00 : f32
    %30 = vector.broadcast %cst_16 : f32 to vector<16x256xf32>
    %31 = arith.maximumf %29, %30 : vector<16x256xf32>
    %c0_17 = arith.constant 0 : index
    %c0_18 = arith.constant 0 : index
    %32 = vector.load %arg8[%c0_17, %c0_18] : memref<16x1xf32, #tpu.memory_space<vmem>>, vector<16x1xf32>
    %33 = vector.broadcast %32 : vector<16x1xf32> to vector<16x256xf32>
    %34 = arith.mulf %33, %31 : vector<16x256xf32>
    %cst_19 = arith.constant dense<0.000000e+00> : vector<256xf32>
    %35 = vector.multi_reduction <add>, %34, %cst_19 [0] : vector<16x256xf32> to vector<256xf32>
    %36 = vector.shape_cast %35 : vector<256xf32> to vector<1x256xf32>
    %c0_20 = arith.constant 0 : index
    %c0_21 = arith.constant 0 : index
    %37 = vector.load %arg9[%c0_20, %c0_21] : memref<1x1xf32, #tpu.memory_space<vmem>>, vector<1x1xf32>
    %38 = vector.broadcast %37 : vector<1x1xf32> to vector<1x256xf32>
    %39 = arith.addf %36, %38 : vector<1x256xf32>
    %cst_22 = arith.constant 0.000000e+00 : f32
    %40 = vector.broadcast %cst_22 : f32 to vector<1x256xf32>
    %41 = arith.maximumf %39, %40 : vector<1x256xf32>
    %c0_23 = arith.constant 0 : index
    %c0_24 = arith.constant 0 : index
    %42 = vector.load %arg10[%c0_23, %c0_24] : memref<1x256xf32, #tpu.memory_space<vmem>>, vector<1x256xf32>
    tpu.vector_store %arg10[%c0_23, %c0_24], %41 {strides = array<i32>} : memref<1x256xf32, #tpu.memory_space<vmem>>, vector<1x256xf32>,
    return
  }
  func.func @transform_0(%arg0: i32) -> (i32, i32) {
    %c0_i32 = arith.constant 0 : i32
    %c0_i32_0 = arith.constant 0 : i32
    return %c0_i32, %arg0 : i32, i32
  }
  func.func @transform_1(%arg0: i32) -> (i32, i32) {
    %c0_i32 = arith.constant 0 : i32
    %c0_i32_0 = arith.constant 0 : i32
    %c0_i32_1 = arith.constant 0 : i32
    return %c0_i32, %c0_i32_0 : i32, i32
  }
  func.func @transform_2(%arg0: i32) -> (i32, i32) {
    %c0_i32 = arith.constant 0 : i32
    %c0_i32_0 = arith.constant 0 : i32
    %c0_i32_1 = arith.constant 0 : i32
    return %c0_i32, %c0_i32_0 : i32, i32
  }
  func.func @transform_3(%arg0: i32) -> (i32, i32) {
    %c0_i32 = arith.constant 0 : i32
    %c0_i32_0 = arith.constant 0 : i32
    %c0_i32_1 = arith.constant 0 : i32
    return %c0_i32, %c0_i32_0 : i32, i32
  }
  func.func @transform_4(%arg0: i32) -> (i32, i32) {
    %c0_i32 = arith.constant 0 : i32
    %c0_i32_0 = arith.constant 0 : i32
    %c0_i32_1 = arith.constant 0 : i32
    return %c0_i32, %c0_i32_0 : i32, i32
  }
  func.func @transform_5(%arg0: i32) -> (i32, i32) {
    %c0_i32 = arith.constant 0 : i32
    %c0_i32_0 = arith.constant 0 : i32
    %c0_i32_1 = arith.constant 0 : i32
    return %c0_i32, %c0_i32_0 : i32, i32
  }
  func.func @transform_6(%arg0: i32) -> (i32, i32) {
    %c0_i32 = arith.constant 0 : i32
    %c0_i32_0 = arith.constant 0 : i32
    %c0_i32_1 = arith.constant 0 : i32
    return %c0_i32, %c0_i32_0 : i32, i32
  }
  func.func @transform_7(%arg0: i32) -> (i32, i32) {
    %c0_i32 = arith.constant 0 : i32
    %c0_i32_0 = arith.constant 0 : i32
    %c0_i32_1 = arith.constant 0 : i32
    return %c0_i32, %c0_i32_0 : i32, i32
  }
  func.func @transform_8(%arg0: i32) -> (i32, i32) {
    %c0_i32 = arith.constant 0 : i32
    %c0_i32_0 = arith.constant 0 : i32
    %c0_i32_1 = arith.constant 0 : i32
    return %c0_i32, %c0_i32_0 : i32, i32
  }
  func.func @transform_9(%arg0: i32) -> (i32, i32) {
    %c0_i32 = arith.constant 0 : i32
    %c0_i32_0 = arith.constant 0 : i32
    return %c0_i32, %arg0 : i32, i32
  }
}

</mosaic_0001>

<llo_original>
// kernel: tpu_custom_call.1
$region0: #{tpu_custom_call.1}
  #allocation0 [shape = 'u32[]', space=smem, size = 0x4, offset = 0x4, fixed_abs, tag = 'smem constant byte address 0x4 - core index']
  #allocation1 [shape = 'u32[72,128]{1,0:T(1,128)}', space=vmem, size = 0x9000, scoped, tag = 'internal scratch']
  #allocation2 [shape = 'f32[1,1]{1,0:T(1,128)S(1)}', space=vmem, size = 0x200, scoped, tag = 'scoped memory for tpu_custom_call.1']
  %s0 = inlined_call_operand.vmem [shape: f32[2,512], index: 0, kind: input, shape index: {}]
  %s1 = inlined_call_operand.vmem [shape: f32[32,2], index: 1, kind: input, shape index: {}]
  %s2 = inlined_call_operand.vmem [shape: f32[32,1], index: 2, kind: input, shape index: {}]
  %s3 = inlined_call_operand.vmem [shape: f32[64,32], index: 3, kind: input, shape index: {}]
  %s4 = inlined_call_operand.vmem [shape: f32[64,1], index: 4, kind: input, shape index: {}]
  %s5 = inlined_call_operand.vmem [shape: f32[16,64], index: 5, kind: input, shape index: {}]
  %s6 = inlined_call_operand.vmem [shape: f32[16,1], index: 6, kind: input, shape index: {}]
  %s7 = inlined_call_operand.vmem [shape: f32[16,1], index: 7, kind: input, shape index: {}]
  %s8 = inlined_call_operand.<no memory space> [shape: f32[1,1], index: 8, kind: input, shape index: {}]
  %s9 = inlined_call_operand.hbm [shape: f32[1,512], index: 9, kind: output, shape index: {}]
  %s10 = sld [smem:[#allocation0]]
  $region69: #{tpu_custom_call.1} parent=0
    _
  %s12 = ssub.s32 1, %s10
  %s13 = scalar_select 0, %s12, %s10
  %v14 = vstv %s8
  %15 = vst [vmem:[#allocation2] sm:$0x1] %v14
  $region1: #{tpu_custom_call.1} parent=0
    #allocation3 [shape = 'u8[2048]{0}', space=vmem, size = 0x800, scoped, tag = 'output window, operand 0']
    #allocation4 [shape = 's32[2]{0}', space=sflag, size = 0x8, scoped, tag = 'scoped memory for tpu_custom_call.1']
    %16 = vsyncpa [#allocation4], 0
    %s17 = scalar_lea.sflag [#allocation4], 1
    %18 = vsyncpa %s17, 0
    loop: start=0, step=1, limit=4
    $region2: #{tpu_custom_call.1} parent=1 // loop_pre_header
      _
    $region3: #{tpu_custom_call.1} parent=1 // loop_header
      %s20 = sphi 0, %s24
      %p21 = scmp.ge.s32.totalorder %s20, 4
      %s30 = sphi 0, %s32
      %s33 = sphi 0, %s30
      %s34 = sphi 0, %s33
      %s50 = sphi 0, %s34
      %s54 = sphi 0, %s54
      %s56 = sphi 0, %s54
      %s57 = sphi 0, %s56
      %s71 = sphi 0, %s57
      %s75 = sphi 0, %s75
      %s77 = sphi 0, %s75
      %s78 = sphi 0, %s77
      %s92 = sphi 0, %s78
      %s96 = sphi 0, %s96
      %s98 = sphi 0, %s96
      %s99 = sphi 0, %s98
      %s113 = sphi 0, %s99
      %s117 = sphi 0, %s117
      %s119 = sphi 0, %s117
      %s120 = sphi 0, %s119
      %s134 = sphi 0, %s120
      %s138 = sphi 0, %s138
      %s140 = sphi 0, %s138
      %s141 = sphi 0, %s140
      %s155 = sphi 0, %s141
      %s159 = sphi 0, %s159
      %s161 = sphi 0, %s159
      %s162 = sphi 0, %s161
      %s176 = sphi 0, %s162
      %s180 = sphi 0, %s180
      %s182 = sphi 0, %s180
      %s183 = sphi 0, %s182
      %s197 = sphi 0, %s183
      %s201 = sphi 0, %s201
      %s203 = sphi 0, %s201
      %s204 = sphi 0, %s203
      %s218 = sphi 0, %s204
      %s224 = sphi 0, %s226
      %s227 = sphi 0, %s224
      %s228 = sphi 0, %s227
      %s244 = sphi 0, %s228
    $region4: #{tpu_custom_call.1} parent=1 // loop_header_branch
      %23 = sbr.rel (%p21) target = $region8
    $region5: #{tpu_custom_call.1} parent=1 // loop_body
      %s25 = ssub.s32 %s20, 1
      %s26 = ssub.s32 %s20, 2
      %s27 = sadd.s32 %s20, 1
      %s28 = ssub.s32 %s20, %s27
      %p29 = scmp.eq.s32.totalorder %s28, 0
      %s31 = sadd.s32 %s30, 1
      %s32 = scalar_select %p29, %s30, %s31
      %p35 = pneg %p29
      %p36 = scmp.eq.s32.totalorder %s20, 1
      %p37 = por %p35, %p36
      %p38 = scmp.ne.s32.totalorder %s30, %s33
      %p39 = scmp.eq.s32.totalorder %s20, 0
      %p40 = por %p38, %p39
      %p41 = scmp.ne.s32.totalorder %s30, %s33
      %p42 = scmp.eq.s32.totalorder %s25, 1
      %p43 = por %p41, %p42
      %p44 = scmp.ne.s32.totalorder %s33, %s34
      %p45 = scmp.eq.s32.totalorder %s25, 0
      %p46 = por %p44, %p45
      %p47 = scmp.ne.s32.totalorder %s33, %s34
      %p48 = scmp.eq.s32.totalorder %s26, 1
      %p49 = por %p47, %p48
      %p51 = scmp.ne.s32.totalorder %s34, %s50
      %p52 = scmp.eq.s32.totalorder %s26, 0
      %p53 = por %p51, %p52
      %s55 = sadd.s32 %s54, 1
      %p58 = scmp.eq.s32.totalorder %s20, 1
      %p59 = scmp.ne.s32.totalorder %s54, %s56
      %p60 = scmp.eq.s32.totalorder %s20, 0
      %p61 = por %p59, %p60
      %p62 = scmp.ne.s32.totalorder %s54, %s56
      %p63 = scmp.eq.s32.totalorder %s25, 1
      %p64 = por %p62, %p63
      %p65 = scmp.ne.s32.totalorder %s56, %s57
      %p66 = scmp.eq.s32.totalorder %s25, 0
      %p67 = por %p65, %p66
      %p68 = scmp.ne.s32.totalorder %s56, %s57
      %p69 = scmp.eq.s32.totalorder %s26, 1
      %p70 = por %p68, %p69
      %p72 = scmp.ne.s32.totalorder %s57, %s71
      %p73 = scmp.eq.s32.totalorder %s26, 0
      %p74 = por %p72, %p73
      %s76 = sadd.s32 %s75, 1
      %p79 = scmp.eq.s32.totalorder %s20, 1
      %p80 = scmp.ne.s32.totalorder %s75, %s77
      %p81 = scmp.eq.s32.totalorder %s20, 0
      %p82 = por %p80, %p81
      %p83 = scmp.ne.s32.totalorder %s75, %s77
      %p84 = scmp.eq.s32.totalorder %s25, 1
      %p85 = por %p83, %p84
      %p86 = scmp.ne.s32.totalorder %s77, %s78
      %p87 = scmp.eq.s32.totalorder %s25, 0
      %p88 = por %p86, %p87
      %p89 = scmp.ne.s32.totalorder %s77, %s78
      %p90 = scmp.eq.s32.totalorder %s26, 1
      %p91 = por %p89, %p90
      %p93 = scmp.ne.s32.totalorder %s78, %s92
      %p94 = scmp.eq.s32.totalorder %s26, 0
      %p95 = por %p93, %p94
      %s97 = sadd.s32 %s96, 1
      %p100 = scmp.eq.s32.totalorder %s20, 1
      %p101 = scmp.ne.s32.totalorder %s96, %s98
      %p102 = scmp.eq.s32.totalorder %s20, 0
      %p103 = por %p101, %p102
      %p104 = scmp.ne.s32.totalorder %s96, %s98
      %p105 = scmp.eq.s32.totalorder %s25, 1
      %p106 = por %p104, %p105
      %p107 = scmp.ne.s32.totalorder %s98, %s99
      %p108 = scmp.eq.s32.totalorder %s25, 0
      %p109 = por %p107, %p108
      %p110 = scmp.ne.s32.totalorder %s98, %s99
      %p111 = scmp.eq.s32.totalorder %s26, 1
      %p112 = por %p110, %p111
      %p114 = scmp.ne.s32.totalorder %s99, %s113
      %p115 = scmp.eq.s32.totalorder %s26, 0
      %p116 = por %p114, %p115
      %s118 = sadd.s32 %s117, 1
      %p121 = scmp.eq.s32.totalorder %s20, 1
      %p122 = scmp.ne.s32.totalorder %s117, %s119
      %p123 = scmp.eq.s32.totalorder %s20, 0
      %p124 = por %p122, %p123
      %p125 = scmp.ne.s32.totalorder %s117, %s119
      %p126 = scmp.eq.s32.totalorder %s25, 1
      %p127 = por %p125, %p126
      %p128 = scmp.ne.s32.totalorder %s119, %s120
      %p129 = scmp.eq.s32.totalorder %s25, 0
      %p130 = por %p128, %p129
      %p131 = scmp.ne.s32.totalorder %s119, %s120
      %p132 = scmp.eq.s32.totalorder %s26, 1
      %p133 = por %p131, %p132
      %p135 = scmp.ne.s32.totalorder %s120, %s134
      %p136 = scmp.eq.s32.totalorder %s26, 0
      %p137 = por %p135, %p136
      %s139 = sadd.s32 %s138, 1
      %p142 = scmp.eq.s32.totalorder %s20, 1
      %p143 = scmp.ne.s32.totalorder %s138, %s140
      %p144 = scmp.eq.s32.totalorder %s20, 0
      %p145 = por %p143, %p144
      %p146 = scmp.ne.s32.totalorder %s138, %s140
      %p147 = scmp.eq.s32.totalorder %s25, 1
      %p148 = por %p146, %p147
      %p149 = scmp.ne.s32.totalorder %s140, %s141
      %p150 = scmp.eq.s32.totalorder %s25, 0
      %p151 = por %p149, %p150
      %p152 = scmp.ne.s32.totalorder %s140, %s141
      %p153 = scmp.eq.s32.totalorder %s26, 1
      %p154 = por %p152, %p153
      %p156 = scmp.ne.s32.totalorder %s141, %s155
      %p157 = scmp.eq.s32.totalorder %s26, 0
      %p158 = por %p156, %p157
      %s160 = sadd.s32 %s159, 1
      %p163 = scmp.eq.s32.totalorder %s20, 1
      %p164 = scmp.ne.s32.totalorder %s159, %s161
      %p165 = scmp.eq.s32.totalorder %s20, 0
      %p166 = por %p164, %p165
      %p167 = scmp.ne.s32.totalorder %s159, %s161
      %p168 = scmp.eq.s32.totalorder %s25, 1
      %p169 = por %p167, %p168
      %p170 = scmp.ne.s32.totalorder %s161, %s162
      %p171 = scmp.eq.s32.totalorder %s25, 0
      %p172 = por %p170, %p171
      %p173 = scmp.ne.s32.totalorder %s161, %s162
      %p174 = scmp.eq.s32.totalorder %s26, 1
      %p175 = por %p173, %p174
      %p177 = scmp.ne.s32.totalorder %s162, %s176
      %p178 = scmp.eq.s32.totalorder %s26, 0
      %p179 = por %p177, %p178
      %s181 = sadd.s32 %s180, 1
      %p184 = scmp.eq.s32.totalorder %s20, 1
      %p185 = scmp.ne.s32.totalorder %s180, %s182
      %p186 = scmp.eq.s32.totalorder %s20, 0
      %p187 = por %p185, %p186
      %p188 = scmp.ne.s32.totalorder %s180, %s182
      %p189 = scmp.eq.s32.totalorder %s25, 1
      %p190 = por %p188, %p189
      %p191 = scmp.ne.s32.totalorder %s182, %s183
      %p192 = scmp.eq.s32.totalorder %s25, 0
      %p193 = por %p191, %p192
      %p194 = scmp.ne.s32.totalorder %s182, %s183
      %p195 = scmp.eq.s32.totalorder %s26, 1
      %p196 = por %p194, %p195
      %p198 = scmp.ne.s32.totalorder %s183, %s197
      %p199 = scmp.eq.s32.totalorder %s26, 0
      %p200 = por %p198, %p199
      %s202 = sadd.s32 %s201, 1
      %p205 = scmp.eq.s32.totalorder %s20, 1
      %p206 = scmp.ne.s32.totalorder %s201, %s203
      %p207 = scmp.eq.s32.totalorder %s20, 0
      %p208 = por %p206, %p207
      %p209 = scmp.ne.s32.totalorder %s201, %s203
      %p210 = scmp.eq.s32.totalorder %s25, 1
      %p211 = por %p209, %p210
      %p212 = scmp.ne.s32.totalorder %s203, %s204
      %p213 = scmp.eq.s32.totalorder %s25, 0
      %p214 = por %p212, %p213
      %p215 = scmp.ne.s32.totalorder %s203, %s204
      %p216 = scmp.eq.s32.totalorder %s26, 1
      %p217 = por %p215, %p216
      %p219 = scmp.ne.s32.totalorder %s204, %s218
      %p220 = scmp.eq.s32.totalorder %s26, 0
      %p221 = por %p219, %p220
      %s222 = ssub.s32 %s20, %s27
      %p223 = scmp.eq.s32.totalorder %s222, 0
      %s225 = sadd.s32 %s224, 1
      %s226 = scalar_select %p223, %s224, %s225
      %p229 = pneg %p223
      %p230 = scmp.eq.s32.totalorder %s20, 1
      %p231 = por %p229, %p230
      %p232 = scmp.ne.s32.totalorder %s224, %s227
      %p233 = scmp.eq.s32.totalorder %s20, 0
      %p234 = por %p232, %p233
      %p235 = scmp.ne.s32.totalorder %s224, %s227
      %p236 = scmp.eq.s32.totalorder %s25, 1
      %p237 = por %p235, %p236
      %p238 = scmp.ne.s32.totalorder %s227, %s228
      %p239 = scmp.eq.s32.totalorder %s25, 0
      %p240 = por %p238, %p239
      %p241 = scmp.ne.s32.totalorder %s227, %s228
      %p242 = scmp.eq.s32.totalorder %s26, 1
      %p243 = por %p241, %p242
      %p245 = scmp.ne.s32.totalorder %s228, %s244
      %p246 = scmp.eq.s32.totalorder %s26, 0
      %p247 = por %p245, %p246
      %p248 = scmp.le.s32.totalorder 1, %s20
      %p249 = scmp.lt.s32.totalorder %s20, 3
      %p250 = pnand %p248, %p249
      %p251 = pneg %p250
      // Predicated region
      $region9: #{tpu_custom_call.1} parent=5 // pred_check
        _
      $region10: #{tpu_custom_call.1} parent=5 // pred_check_branch
        %253 = sbr.rel (%p250) target = $region12
      $region11: #{tpu_custom_call.1} parent=5 // pred_region
        %s254 = ssub.s32 %s20, 1
        // Predicated region
        $region13: #{tpu_custom_call.1} parent=11 // pred_check
          %p255 = pneg %p67
        $region14: #{tpu_custom_call.1} parent=11 // pred_check_branch
          %257 = sbr.rel (%p255) target = $region16
        $region15: #{tpu_custom_call.1} parent=11 // pred_region
          _
        $region16: #{tpu_custom_call.1} parent=11 // pred_fallthru
          _
        // Predicated region
        $region17: #{tpu_custom_call.1} parent=11 // pred_check
          %p258 = pneg %p88
        $region18: #{tpu_custom_call.1} parent=11 // pred_check_branch
          %260 = sbr.rel (%p258) target = $region20
        $region19: #{tpu_custom_call.1} parent=11 // pred_region
          _
        $region20: #{tpu_custom_call.1} parent=11 // pred_fallthru
          _
        // Predicated region
        $region21: #{tpu_custom_call.1} parent=11 // pred_check
          %p261 = pneg %p109
        $region22: #{tpu_custom_call.1} parent=11 // pred_check_branch
          %263 = sbr.rel (%p261) target = $region24
        $region23: #{tpu_custom_call.1} parent=11 // pred_region
          _
        $region24: #{tpu_custom_call.1} parent=11 // pred_fallthru
          _
        // Predicated region
        $region25: #{tpu_custom_call.1} parent=11 // pred_check
          %p264 = pneg %p130
        $region26: #{tpu_custom_call.1} parent=11 // pred_check_branch
          %266 = sbr.rel (%p264) target = $region28
        $region27: #{tpu_custom_call.1} parent=11 // pred_region
          _
        $region28: #{tpu_custom_call.1} parent=11 // pred_fallthru
          _
        // Predicated region
        $region29: #{tpu_custom_call.1} parent=11 // pred_check
          %p267 = pneg %p151
        $region30: #{tpu_custom_call.1} parent=11 // pred_check_branch
          %269 = sbr.rel (%p267) target = $region32
        $region31: #{tpu_custom_call.1} parent=11 // pred_region
          _
        $region32: #{tpu_custom_call.1} parent=11 // pred_fallthru
          _
        // Predicated region
        $region33: #{tpu_custom_call.1} parent=11 // pred_check
          %p270 = pneg %p172
        $region34: #{tpu_custom_call.1} parent=11 // pred_check_branch
          %272 = sbr.rel (%p270) target = $region36
        $region35: #{tpu_custom_call.1} parent=11 // pred_region
          _
        $region36: #{tpu_custom_call.1} parent=11 // pred_fallthru
          _
        // Predicated region
        $region37: #{tpu_custom_call.1} parent=11 // pred_check
          %p273 = pneg %p193
        $region38: #{tpu_custom_call.1} parent=11 // pred_check_branch
          %275 = sbr.rel (%p273) target = $region40
        $region39: #{tpu_custom_call.1} parent=11 // pred_region
          _
        $region40: #{tpu_custom_call.1} parent=11 // pred_fallthru
          _
        // Predicated region
        $region41: #{tpu_custom_call.1} parent=11 // pred_check
          %p276 = pneg %p214
        $region42: #{tpu_custom_call.1} parent=11 // pred_check_branch
          %278 = sbr.rel (%p276) target = $region44
        $region43: #{tpu_custom_call.1} parent=11 // pred_region
          _
        $region44: #{tpu_custom_call.1} parent=11 // pred_fallthru
          _
      $region12: #{tpu_custom_call.1} parent=5 // pred_fallthru
        _
      %p279 = scmp.lt.s32.totalorder %s20, 2
      // Predicated region
      $region45: #{tpu_custom_call.1} parent=5 // pred_check
        %p280 = pneg %p279
      $region46: #{tpu_custom_call.1} parent=5 // pred_check_branch
        %282 = sbr.rel (%p280) target = $region48
      $region47: #{tpu_custom_call.1} parent=5 // pred_region
        // Predicated region
        $region49: #{tpu_custom_call.1} parent=47 // pred_check
          %p283 = pneg %p40
        $region50: #{tpu_custom_call.1} parent=47 // pred_check_branch
          %285 = sbr.rel (%p283) target = $region52
        $region51: #{tpu_custom_call.1} parent=47 // pred_region
          %s286 = smul.u32 2, %s20
          %p287 = scmp.lt.s32.totalorder %s286, 3
          %s288 = scalar_select %p287, %s286, 3
          %s289 = smul.addr %s288, 2
          %s290 = scalar_lea.vmem %s0, %s289
          %s291 = smul.u32 2, %s20
        $region52: #{tpu_custom_call.1} parent=47 // pred_fallthru
          _
      $region48: #{tpu_custom_call.1} parent=5 // pred_fallthru
        _
      %p292 = scmp.le.s32.totalorder 1, %s20
      %p293 = scmp.lt.s32.totalorder %s20, 3
      %p294 = pnand %p292, %p293
      %p295 = pneg %p294
      // Predicated region
      $region53: #{tpu_custom_call.1} parent=5 // pred_check
        _
      $region54: #{tpu_custom_call.1} parent=5 // pred_check_branch
        %297 = sbr.rel (%p294) target = $region56
      $region55: #{tpu_custom_call.1} parent=5 // pred_region
        %s298 = ssub.s32 %s20, 1
        %s299 = smul.u32 2, %s25
        %p300 = scmp.lt.s32.totalorder %s299, 3
        %s301 = scalar_select %p300, %s299, 3
        %s302 = smul.addr %s301, 2
        %s303 = scalar_lea.vmem %s0, %s302
        %p304 = pneg %p46
        %p305 = pneg %p43
        %p306 = pneg %p67
        %p307 = pneg %p64
        %p308 = pneg %p88
        %p309 = pneg %p85
        %p310 = pneg %p109
        %p311 = pneg %p106
        %p312 = pneg %p130
        %p313 = pneg %p127
        %p314 = pneg %p151
        %p315 = pneg %p148
        %p316 = pneg %p172
        %p317 = pneg %p169
        %p318 = pneg %p193
        %p319 = pneg %p190
        %p320 = pneg %p214
        %p321 = pneg %p211
        %p322 = pneg %p240
        %p323 = pneg %p237
        %s324 = sand.u32 %s227, 1
        %s325 = scalar_lea.sflag [#allocation4], %s324
        %s326 = sand.u32 %s227, 1
        %s327 = smul.addr %s326, 2
        %s328 = scalar_lea.vmem [#allocation3], %s327
        %s329 = smul.u32 2, %s25
        %p330 = scmp.lt.s32.totalorder %s329, 3
        %s331 = scalar_select %p330, %s329, 3
        %s332 = smul.addr %s331, 2
        %s333 = scalar_lea.vmem %s0, %s332
        %s334 = smul.u32 2, %s25
        %s335 = smul.u32 2, %s25
        %v336 = vld [vmem:[%s333] sm:$0xf]
        %v337 = vld [vmem:[%s1] sm:$0xff]
        %v338 = vld [vmem:[%s1 + $0x8] sm:$0xff]
        %v339 = vld [vmem:[%s1 + $0x10] sm:$0xff]
        %v340 = vld [vmem:[%s1 + $0x18] sm:$0xff]
        %342 = vset.pattern.permute.xlu0 0
        %343 = vperm.xlu0 %342, %v337
        %v344 = vpop.permute.xlu0 %343
        %347 = vset.pattern.permute.xlu0 0
        %348 = vperm.xlu0 %347, %v338
        %v349 = vpop.permute.xlu0 %348
        %352 = vset.pattern.permute.xlu0 0
        %353 = vperm.xlu0 %352, %v339
        %v354 = vpop.permute.xlu0 %353
        %357 = vset.pattern.permute.xlu0 0
        %358 = vperm.xlu0 %357, %v340
        %v359 = vpop.permute.xlu0 %358
        %v362 = vperm.slane %v336, 0
        %v363 = vperm.slane %v336, 2
        %v366 = vperm.slane %v362, 0
        %v367 = vperm.slane %v363, 0
        %v368 = vmul.f32 %v344, %v366
        %v369 = vmul.f32 %v344, %v367
        %v370 = vmul.f32 %v349, %v366
        %v371 = vmul.f32 %v349, %v367
        %v372 = vmul.f32 %v354, %v366
        %v373 = vmul.f32 %v354, %v367
        %v374 = vmul.f32 %v359, %v366
        %v375 = vmul.f32 %v359, %v367
        %376 = vset.pattern.permute.xlu0 1
        %377 = vperm.xlu0 %376, %v337
        %v378 = vpop.permute.xlu0 %377
        %380 = vset.pattern.permute.xlu0 1
        %381 = vperm.xlu0 %380, %v338
        %v382 = vpop.permute.xlu0 %381
        %384 = vset.pattern.permute.xlu0 1
        %385 = vperm.xlu0 %384, %v339
        %v386 = vpop.permute.xlu0 %385
        %388 = vset.pattern.permute.xlu0 1
        %389 = vperm.xlu0 %388, %v340
        %v390 = vpop.permute.xlu0 %389
        %v392 = vperm.slane %v336, 1
        %v393 = vperm.slane %v336, 3
        %v396 = vperm.slane %v392, 1
        %v397 = vperm.slane %v393, 1
        %v398 = vmul.f32 %v378, %v396
        %v399 = vmul.f32 %v378, %v397
        %v400 = vmul.f32 %v382, %v396
        %v401 = vmul.f32 %v382, %v397
        %v402 = vmul.f32 %v386, %v396
        %v403 = vmul.f32 %v386, %v397
        %v404 = vmul.f32 %v390, %v396
        %v405 = vmul.f32 %v390, %v397
        %v406 = vadd.f32 %v368, %v398
        %v407 = vadd.f32 %v369, %v399
        %v408 = vadd.f32 %v370, %v400
        %v409 = vadd.f32 %v371, %v401
        %v410 = vadd.f32 %v372, %v402
        %v411 = vadd.f32 %v373, %v403
        %v412 = vadd.f32 %v374, %v404
        %v413 = vadd.f32 %v375, %v405
        %v414 = vld [vmem:[%s2] sm:$0xff]
        %v415 = vld [vmem:[%s2 + $0x8] sm:$0xff]
        %v416 = vld [vmem:[%s2 + $0x10] sm:$0xff]
        %v417 = vld [vmem:[%s2 + $0x18] sm:$0xff]
        %419 = vset.pattern.permute.xlu0 0
        %420 = vperm.xlu0 %419, %v414
        %v421 = vpop.permute.xlu0 %420
        %424 = vset.pattern.permute.xlu0 0
        %425 = vperm.xlu0 %424, %v415
        %v426 = vpop.permute.xlu0 %425
        %429 = vset.pattern.permute.xlu0 0
        %430 = vperm.xlu0 %429, %v416
        %v431 = vpop.permute.xlu0 %430
        %434 = vset.pattern.permute.xlu0 0
        %435 = vperm.xlu0 %434, %v417
        %v436 = vpop.permute.xlu0 %435
        %v438 = vadd.f32 %v406, %v421
        %v439 = vadd.f32 %v407, %v421
        %v440 = vadd.f32 %v408, %v426
        %v441 = vadd.f32 %v409, %v426
        %v442 = vadd.f32 %v410, %v431
        %v443 = vadd.f32 %v411, %v431
        %v444 = vadd.f32 %v412, %v436
        %v445 = vadd.f32 %v413, %v436
        %v446 = vmax.f32 %v438, 0.0
        %v447 = vmax.f32 %v439, 0.0
        %v448 = vmax.f32 %v440, 0.0
        %v449 = vmax.f32 %v441, 0.0
        %v450 = vmax.f32 %v442, 0.0
        %v451 = vmax.f32 %v443, 0.0
        %v452 = vmax.f32 %v444, 0.0
        %v453 = vmax.f32 %v445, 0.0
        %v454 = vld [vmem:[%s3] sm:$0xff]
        %v455 = vld [vmem:[%s3 + $0x8] sm:$0xff]
        %v456 = vld [vmem:[%s3 + $0x10] sm:$0xff]
        %v457 = vld [vmem:[%s3 + $0x18] sm:$0xff]
        %v458 = vld [vmem:[%s3 + $0x20] sm:$0xff]
        %v459 = vld [vmem:[%s3 + $0x28] sm:$0xff]
        %v460 = vld [vmem:[%s3 + $0x30] sm:$0xff]
        %v461 = vld [vmem:[%s3 + $0x38] sm:$0xff]
        %v462 = vld [vmem:[%s4] sm:$0xff]
        %v463 = vld [vmem:[%s4 + $0x8] sm:$0xff]
        %v464 = vld [vmem:[%s4 + $0x10] sm:$0xff]
        %v465 = vld [vmem:[%s4 + $0x18] sm:$0xff]
        %v466 = vld [vmem:[%s4 + $0x20] sm:$0xff]
        %v467 = vld [vmem:[%s4 + $0x28] sm:$0xff]
        %v468 = vld [vmem:[%s4 + $0x30] sm:$0xff]
        %v469 = vld [vmem:[%s4 + $0x38] sm:$0xff]
        %471 = vset.pattern.permute.xlu0 0
        %472 = vperm.xlu0 %471, %v462
        %v473 = vpop.permute.xlu0 %472
        %476 = vset.pattern.permute.xlu0 0
        %477 = vperm.xlu0 %476, %v463
        %v478 = vpop.permute.xlu0 %477
        %481 = vset.pattern.permute.xlu0 0
        %482 = vperm.xlu0 %481, %v464
        %v483 = vpop.permute.xlu0 %482
        %486 = vset.pattern.permute.xlu0 0
        %487 = vperm.xlu0 %486, %v465
        %v488 = vpop.permute.xlu0 %487
        %491 = vset.pattern.permute.xlu0 0
        %492 = vperm.xlu0 %491, %v466
        %v493 = vpop.permute.xlu0 %492
        %496 = vset.pattern.permute.xlu0 0
        %497 = vperm.xlu0 %496, %v467
        %v498 = vpop.permute.xlu0 %497
        %501 = vset.pattern.permute.xlu0 0
        %502 = vperm.xlu0 %501, %v468
        %v503 = vpop.permute.xlu0 %502
        %506 = vset.pattern.permute.xlu0 0
        %507 = vperm.xlu0 %506, %v469
        %v508 = vpop.permute.xlu0 %507
        %vm510 = vcmask 261120
        %v512 = vsel %vm510, %v454, 0
        %v515 = vsel %vm510, %v455, 0
        %v518 = vsel %vm510, %v456, 0
        %v521 = vsel %vm510, %v457, 0
        %v524 = vsel %vm510, %v458, 0
        %v527 = vsel %vm510, %v459, 0
        %v530 = vsel %vm510, %v460, 0
        %v533 = vsel %vm510, %v461, 0
        %535 = vmatpush.msra.mxu0 0.0
        %536 = vmatpush.msra.mxu0 0.0
        %537 = vmatpush.msra.mxu0 0.0
        %538 = vmatpush.msra.mxu0 0.0
        %539 = vmatpush.msra.mxu0 0.0
        %540 = vmatpush.msra.mxu0 0.0
        %541 = vmatpush.msra.mxu0 0.0
        %542 = vmatpush.msra.mxu0 0.0
        %543 = vmatpush.msra.mxu0 0.0
        %544 = vmatpush.msra.mxu0 0.0
        %545 = vmatpush.msra.mxu0 0.0
        %546 = vmatpush.msra.mxu0 0.0
        %547 = vmatpush.msra.mxu0 %v452
        %548 = vmatpush.msra.mxu0 %v450
        %549 = vmatpush.msra.mxu0 %v448
        %550 = vmatpush.msra.mxu0 %v446
        %551 = vmatmul.f32.gmra.mxu0 %v512
        %v552 = vpop.f32.mrf.mxu0
        %v553 = vadd.f32 %v473, %v552
        %554 = vmatmul.f32.gmra.mxu0 %v515
        %v555 = vpop.f32.mrf.mxu0
        %v556 = vadd.f32 %v478, %v555
        %557 = vmatmul.f32.gmra.mxu0 %v518
        %v558 = vpop.f32.mrf.mxu0
        %v559 = vadd.f32 %v483, %v558
        %560 = vmatmul.f32.gmra.mxu0 %v521
        %v561 = vpop.f32.mrf.mxu0
        %v562 = vadd.f32 %v488, %v561
        %563 = vmatmul.f32.gmra.mxu0 %v524
        %v564 = vpop.f32.mrf.mxu0
        %v565 = vadd.f32 %v493, %v564
        %566 = vmatmul.f32.gmra.mxu0 %v527
        %v567 = vpop.f32.mrf.mxu0
        %v568 = vadd.f32 %v498, %v567
        %569 = vmatmul.f32.gmra.mxu0 %v530
        %v570 = vpop.f32.mrf.mxu0
        %v571 = vadd.f32 %v503, %v570
        %572 = vmatmul.f32.gmra.mxu0 %v533
        %v573 = vpop.f32.mrf.mxu0
        %v574 = vadd.f32 %v508, %v573
        %575 = vdwg.mxu0
        %576 = vmatpush.msra.mxu0 0.0
        %577 = vmatpush.msra.mxu0 0.0
        %578 = vmatpush.msra.mxu0 0.0
        %579 = vmatpush.msra.mxu0 0.0
        %580 = vmatpush.msra.mxu0 0.0
        %581 = vmatpush.msra.mxu0 0.0
        %582 = vmatpush.msra.mxu0 0.0
        %583 = vmatpush.msra.mxu0 0.0
        %584 = vmatpush.msra.mxu0 0.0
        %585 = vmatpush.msra.mxu0 0.0
        %586 = vmatpush.msra.mxu0 0.0
        %587 = vmatpush.msra.mxu0 0.0
        %588 = vmatpush.msra.mxu0 %v453
        %589 = vmatpush.msra.mxu0 %v451
        %590 = vmatpush.msra.mxu0 %v449
        %591 = vmatpush.msra.mxu0 %v447
        %592 = vmatmul.f32.gmra.mxu0 %v512
        %v593 = vpop.f32.mrf.mxu0
        %v594 = vadd.f32 %v473, %v593
        %595 = vmatmul.f32.gmra.mxu0 %v515
        %v596 = vpop.f32.mrf.mxu0
        %v597 = vadd.f32 %v478, %v596
        %598 = vmatmul.f32.gmra.mxu0 %v518
        %v599 = vpop.f32.mrf.mxu0
        %v600 = vadd.f32 %v483, %v599
        %601 = vmatmul.f32.gmra.mxu0 %v521
        %v602 = vpop.f32.mrf.mxu0
        %v603 = vadd.f32 %v488, %v602
        %604 = vmatmul.f32.gmra.mxu0 %v524
        %v605 = vpop.f32.mrf.mxu0
        %v606 = vadd.f32 %v493, %v605
        %607 = vmatmul.f32.gmra.mxu0 %v527
        %v608 = vpop.f32.mrf.mxu0
        %v609 = vadd.f32 %v498, %v608
        %610 = vmatmul.f32.gmra.mxu0 %v530
        %v611 = vpop.f32.mrf.mxu0
        %v612 = vadd.f32 %v503, %v611
        %613 = vmatmul.f32.gmra.mxu0 %v533
        %v614 = vpop.f32.mrf.mxu0
        %v615 = vadd.f32 %v508, %v614
        %616 = vdwg.mxu0
        %v617 = vmax.f32 %v553, 0.0
        %v618 = vmax.f32 %v594, 0.0
        %v619 = vmax.f32 %v556, 0.0
        %v620 = vmax.f32 %v597, 0.0
        %v621 = vmax.f32 %v559, 0.0
        %v622 = vmax.f32 %v600, 0.0
        %v623 = vmax.f32 %v562, 0.0
        %v624 = vmax.f32 %v603, 0.0
        %v625 = vmax.f32 %v565, 0.0
        %v626 = vmax.f32 %v606, 0.0
        %v627 = vmax.f32 %v568, 0.0
        %v628 = vmax.f32 %v609, 0.0
        %v629 = vmax.f32 %v571, 0.0
        %v630 = vmax.f32 %v612, 0.0
        %v631 = vmax.f32 %v574, 0.0
        %v632 = vmax.f32 %v615, 0.0
        %v633 = vld [vmem:[%s5] sm:$0xff]
        %v634 = vld [vmem:[%s5 + $0x8] sm:$0xff]
        %v635 = vld [vmem:[%s6] sm:$0xff]
        %v636 = vld [vmem:[%s6 + $0x8] sm:$0xff]
        %638 = vset.pattern.permute.xlu0 0
        %639 = vperm.xlu0 %638, %v635
        %v640 = vpop.permute.xlu0 %639
        %643 = vset.pattern.permute.xlu0 0
        %644 = vperm.xlu0 %643, %v636
        %v645 = vpop.permute.xlu0 %644
        %vm647 = vcmask 523264
        %v649 = vsel %vm647, %v633, 0
        %v652 = vsel %vm647, %v634, 0
        %654 = vmatpush.msra.mxu0 0.0
        %655 = vmatpush.msra.mxu0 0.0
        %656 = vmatpush.msra.mxu0 0.0
        %657 = vmatpush.msra.mxu0 0.0
        %658 = vmatpush.msra.mxu0 0.0
        %659 = vmatpush.msra.mxu0 0.0
        %660 = vmatpush.msra.mxu0 0.0
        %661 = vmatpush.msra.mxu0 0.0
        %662 = vmatpush.msra.mxu0 %v631
        %663 = vmatpush.msra.mxu0 %v629
        %664 = vmatpush.msra.mxu0 %v627
        %665 = vmatpush.msra.mxu0 %v625
        %666 = vmatpush.msra.mxu0 %v623
        %667 = vmatpush.msra.mxu0 %v621
        %668 = vmatpush.msra.mxu0 %v619
        %669 = vmatpush.msra.mxu0 %v617
        %670 = vmatmul.f32.gmra.mxu0 %v649
        %v671 = vpop.f32.mrf.mxu0
        %v672 = vadd.f32 %v640, %v671
        %673 = vmatmul.f32.gmra.mxu0 %v652
        %v674 = vpop.f32.mrf.mxu0
        %v675 = vadd.f32 %v645, %v674
        %676 = vdwg.mxu0
        %677 = vmatpush.msra.mxu0 0.0
        %678 = vmatpush.msra.mxu0 0.0
        %679 = vmatpush.msra.mxu0 0.0
        %680 = vmatpush.msra.mxu0 0.0
        %681 = vmatpush.msra.mxu0 0.0
        %682 = vmatpush.msra.mxu0 0.0
        %683 = vmatpush.msra.mxu0 0.0
        %684 = vmatpush.msra.mxu0 0.0
        %685 = vmatpush.msra.mxu0 %v632
        %686 = vmatpush.msra.mxu0 %v630
        %687 = vmatpush.msra.mxu0 %v628
        %688 = vmatpush.msra.mxu0 %v626
        %689 = vmatpush.msra.mxu0 %v624
        %690 = vmatpush.msra.mxu0 %v622
        %691 = vmatpush.msra.mxu0 %v620
        %692 = vmatpush.msra.mxu0 %v618
        %693 = vmatmul.f32.gmra.mxu0 %v649
        %v694 = vpop.f32.mrf.mxu0
        %v695 = vadd.f32 %v640, %v694
        %696 = vmatmul.f32.gmra.mxu0 %v652
        %v697 = vpop.f32.mrf.mxu0
        %v698 = vadd.f32 %v645, %v697
        %699 = vdwg.mxu0
        %v700 = vmax.f32 %v672, 0.0
        %v701 = vmax.f32 %v695, 0.0
        %v702 = vmax.f32 %v675, 0.0
        %v703 = vmax.f32 %v698, 0.0
        %v704 = vld [vmem:[%s7] sm:$0xff]
        %v705 = vld [vmem:[%s7 + $0x8] sm:$0xff]
        %707 = vset.pattern.permute.xlu0 0
        %708 = vperm.xlu0 %707, %v704
        %v709 = vpop.permute.xlu0 %708
        %712 = vset.pattern.permute.xlu0 0
        %713 = vperm.xlu0 %712, %v705
        %v714 = vpop.permute.xlu0 %713
        %v716 = vmul.f32 %v709, %v700
        %v717 = vmul.f32 %v709, %v701
        %v718 = vmul.f32 %v714, %v702
        %v719 = vmul.f32 %v714, %v703
        %v720 = vadd.f32 %v716, %v718
        %v721 = vrot.slane %v720, 4
        %v722 = vadd.f32 %v720, %v721
        %v723 = vrot.slane %v722, 2
        %v724 = vadd.f32 %v722, %v723
        %v725 = vrot.slane %v724, 1
        %v726 = vadd.f32 %v724, %v725
        %v727 = vadd.f32 %v717, %v719
        %v728 = vrot.slane %v727, 4
        %v729 = vadd.f32 %v727, %v728
        %v730 = vrot.slane %v729, 2
        %v731 = vadd.f32 %v729, %v730
        %v732 = vrot.slane %v731, 1
        %v733 = vadd.f32 %v731, %v732
        %v734 = vld [vmem:[#allocation2] sm:$0x1]
        %736 = vset.pattern.permute.xlu0 0
        %737 = vperm.xlu0 %736, %v734
        %v738 = vpop.permute.xlu0 %737
        %v740 = vperm.slane %v738, 0
        %v741 = vadd.f32 %v726, %v740
        %v742 = vadd.f32 %v733, %v740
        %v743 = vmax.f32 %v741, 0.0
        %v744 = vmax.f32 %v742, 0.0
        %v747 = vrot.slane %v744, 7
        %vm748 = vcmask 1040384
        %v749 = vsel %vm748, %v743, %v747
        %v751 = vlaneseq
        %vm752 = vcmp.ge.s32.totalorder %v751, 0
        %vm753 = vcmp.lt.s32.totalorder %v751, 256
        %vm754 = vmand %vm752, %vm753
        %755 = vst.msk [vmem:[%s328] sm:$0x3] %vm754, %v749
        %s756 = sand.u32 %s227, 1
        %s757 = scalar_lea.sflag [#allocation4], %s756
        %s758 = sand.u32 %s227, 1
        %s759 = smul.addr %s758, 2
        %s760 = scalar_lea.vmem [#allocation3], %s759
        // Predicated region
        $region57: #{tpu_custom_call.1} parent=55 // pred_check
          %p761 = pneg %p237
        $region58: #{tpu_custom_call.1} parent=55 // pred_check_branch
          %763 = sbr.rel (%p761) target = $region60
        $region59: #{tpu_custom_call.1} parent=55 // pred_region
          %s764 = smul.u32 2, %s25
          %766 = vsyncadd %s757, 0
          %s767 = scalar_lea.hbm %s9, %s764
          %s769 = sshll.u32 %s760, 4
          %s770 = int_to_ptr.vmem [resolvable:$true] %s769
          %s771 = sshll.u32 %s767, 4
          %s772 = int_to_ptr.hbm [resolvable:$true] %s771
          %774 = dma.vmem_to_hbm [thread:$0]  %s770, 32, %s772, %s757
        $region60: #{tpu_custom_call.1} parent=55 // pred_fallthru
          _
      $region56: #{tpu_custom_call.1} parent=5 // pred_fallthru
        _
      %p775 = scmp.le.s32.totalorder 2, %s20
      // Predicated region
      $region61: #{tpu_custom_call.1} parent=5 // pred_check
        %p776 = pneg %p775
      $region62: #{tpu_custom_call.1} parent=5 // pred_check_branch
        %778 = sbr.rel (%p776) target = $region64
      $region63: #{tpu_custom_call.1} parent=5 // pred_region
        %s779 = ssub.s32 %s20, 2
        // Predicated region
        $region65: #{tpu_custom_call.1} parent=63 // pred_check
          %p780 = pneg %p243
        $region66: #{tpu_custom_call.1} parent=63 // pred_check_branch
          %782 = sbr.rel (%p780) target = $region68
        $region67: #{tpu_custom_call.1} parent=63 // pred_region
          %s783 = sand.u32 %s228, 1
          %s784 = scalar_lea.sflag [#allocation4], %s783
          %s785 = sand.u32 %s228, 1
          %s786 = smul.addr %s785, 2
          %s787 = scalar_lea.vmem [#allocation3], %s786
          %789 = dma.done %s784, 32
        $region68: #{tpu_custom_call.1} parent=63 // pred_fallthru
          _
      $region64: #{tpu_custom_call.1} parent=5 // pred_fallthru
        _
    $region6: #{tpu_custom_call.1} parent=1 // loop_footer
      %s24 = sadd.s32 1, %s20
    $region7: #{tpu_custom_call.1} parent=1 // loop_footer_branch
      %19 = sbr.rel target = $region3
    $region8: #{tpu_custom_call.1} parent=1 // loop_exit
      _
    %790 = vsyncpa [#allocation4], 1
    %s791 = scalar_lea.sflag [#allocation4], 1
    %792 = vsyncpa %s791, 1

</llo_original>
